<compile_context>
chip_gen: v6e
topology: v6e:2x2x1
jax: 0.10.0
libtpu: 0.0.40
codegen_flags: <defaults>
</compile_context>

<pallas_src>
import functools

import jax
import jax.numpy as jnp
from jax.experimental import pallas as pl
from jax.experimental.pallas import tpu as pltpu


_LANE = 128              # pad the 2-wide out_proj output to lane-dense 128 cols
_SINGLE_BUFFER_OK = None  # cache: does this jax build accept pl.Buffered(1)?


def _round_up(a, b):
    return (a + b - 1) // b * b


def _head_kernel(x_ref, w1_ref, b1_ref, w2_ref, b2_ref, o_ref, *, compute_dtype):
    # x_ref : (TM, 2H)    w1_ref: (2H, H)      b1_ref: (1, H)  f32
    # w2_ref: (H, 128)    b2_ref: (1, 128) f32 o_ref : (TM, 128)
    x = x_ref[...]
    if compute_dtype is not None:
        x = x.astype(compute_dtype)          # in-kernel cast: no extra HBM pass
    h = jnp.dot(x, w1_ref[...], preferred_element_type=jnp.float32)
    h = jnp.tanh(h + b1_ref[...])            # bias + tanh stay in f32 vregs
    # out_proj matmul on the same (bf16) MXU path; accumulation stays f32.
    out = jnp.dot(h.astype(w2_ref.dtype), w2_ref[...],
                  preferred_element_type=jnp.float32)
    o_ref[...] = (out + b2_ref[...]).astype(o_ref.dtype)


def _vmem_capacity_bytes():
    try:
        info = pltpu.get_tpu_info()
        cap = getattr(info, "vmem_capacity_bytes", None)
        if cap:
            return int(cap)
    except Exception:
        pass
    return 64 * 1024 * 1024                  # conservative (v7x per-TC VMEM)


def roberta_classification_head(x, w1, b1, w2, b2, *, tm=1024, compute_dtype=None):
    """Forward pass of RobertaClassificationHead.

    x : [..., H] (any leading shape; total elements must be a multiple of 2H)
    w1: [2H, H]  dense weight, (in, out) layout
    b1: [H]
    w2: [H, 2]   out_proj weight, (in, out) layout
    b2: [2]
    tm: target row-tile size.  Larger tiles amortize per-grid-step overhead;
        the wrapper shrinks tm automatically to fit ~80% of VMEM (v7x: 64 MiB
        physical; v5e/v6e: 128 MiB, so 1024-4096 is fine there).
    compute_dtype: e.g. jnp.bfloat16 -> both matmuls on the bf16 MXU path with
        f32 accumulation; x is cast inside the kernel (no extra HBM pass) and
        the padded output is stored bf16.  None keeps full f32.
        bf16 is the recommended setting on v5e (MXU-bound in f32).
    returns: [prod(x.shape) // (2H), 2] in x.dtype
    """
    global _SINGLE_BUFFER_OK

    H = x.shape[-1]
    assert w1.shape == (2 * H, H), f"dense weight must be (2H, H), got {w1.shape}"
    assert w2.shape == (H, 2), f"out_proj weight must be (H, 2), got {w2.shape}"
    assert (x.size % (2 * H)) == 0, "total element count must be divisible by 2*H"

    result_dtype = x.dtype
    x2 = x.reshape(-1, 2 * H)                # matches torch: reshape(-1, size(-1)*2)
    M = x2.shape[0]

    mm2_dtype = compute_dtype if compute_dtype is not None else jnp.float32
    store_dtype = compute_dtype if compute_dtype is not None else result_dtype

    # Weights: one-time (tiny) casts; kept VMEM-resident across the grid.
    w1_in = w1 if compute_dtype is None else w1.astype(compute_dtype)
    b1_row = b1.reshape(1, H).astype(jnp.float32)
    w2_pad = jnp.zeros((H, _LANE), mm2_dtype).at[:, :2].set(w2.astype(mm2_dtype))
    b2_pad = jnp.zeros((1, _LANE), jnp.float32).at[:, :2].set(b2.astype(jnp.float32))

    x_itemsize = jnp.dtype(x2.dtype).itemsize
    w1_itemsize = jnp.dtype(w1_in.dtype).itemsize
    w2_itemsize = jnp.dtype(mm2_dtype).itemsize
    store_itemsize = jnp.dtype(store_dtype).itemsize

    weight_bytes = (2 * H * H * w1_itemsize + H * 4
                    + H * _LANE * w2_itemsize + _LANE * 4)

    def vmem_needed(tm_):
        # x tile + out tile double-buffered; weights counted double-buffered
        # too (covers the fallback where pl.Buffered(1) is unavailable).
        return (2 * tm_ * 2 * H * x_itemsize
                + 2 * tm_ * _LANE * store_itemsize
                + 2 * weight_bytes)

    vmem_target = int(0.8 * _vmem_capacity_bytes())   # headroom for compiler scratch

    # Row tiling: TM multiple of 8; shrink until the budget fits the target.
    tm_eff = _round_up(min(tm, _round_up(M, 8)), 8)
    while vmem_needed(tm_eff) > vmem_target and tm_eff > 256:
        tm_eff = max(256, _round_up(tm_eff // 2, 8))

    num_tiles = pl.cdiv(M, tm_eff)            # ragged last tile handled by Pallas
    needed = vmem_needed(tm_eff)
    vmem_limit = int(min(max(2 * needed, 32 * 1024 * 1024), vmem_target))
    vmem_limit = max(vmem_limit, needed)

    m_total = num_tiles * tm_eff              # rows the kernel actually processes
    cost = pl.CostEstimate(
        flops=2 * m_total * (2 * H) * H + 2 * m_total * H * _LANE,
        transcendentals=m_total * H,
        bytes_accessed=(m_total * 2 * H * x_itemsize
                        + weight_bytes
                        + m_total * _LANE * store_itemsize),
    )

    kernel = functools.partial(_head_kernel, compute_dtype=compute_dtype)

    def build_call(single_buffer_weights):
        res_kwargs = (dict(pipeline_mode=pl.Buffered(1))
                      if single_buffer_weights else {})
        in_specs = [
            pl.BlockSpec((tm_eff, 2 * H), lambda i: (i, 0)),            # streamed x
            pl.BlockSpec((2 * H, H), lambda i: (0, 0), **res_kwargs),   # resident w1
            pl.BlockSpec((1, H), lambda i: (0, 0), **res_kwargs),       # resident b1
            pl.BlockSpec((H, _LANE), lambda i: (0, 0), **res_kwargs),   # resident w2
            pl.BlockSpec((1, _LANE), lambda i: (0, 0), **res_kwargs),   # resident b2
        ]
        return pl.pallas_call(
            kernel,
            out_shape=jax.ShapeDtypeStruct((M, _LANE), store_dtype),
            grid=(num_tiles,),
            in_specs=in_specs,
            out_specs=pl.BlockSpec((tm_eff, _LANE), lambda i: (i, 0)),
            compiler_params=pltpu.CompilerParams(
                # TODO(synk): on v7x verify the row axis actually shards across
                # both TensorCores; if not, switch to pltpu.CORE_PARALLEL.
                dimension_semantics=("parallel",),
                vmem_limit_bytes=vmem_limit,
            ),
            cost_estimate=cost,
        )

    args = (x2, w1_in, b1_row, w2_pad, b2_pad)
    if _SINGLE_BUFFER_OK is None:
        try:
            out_padded = build_call(True)(*args)
            _SINGLE_BUFFER_OK = True
        except Exception:
            # pl.Buffered(1) not supported by this jax build -> default buffering.
            _SINGLE_BUFFER_OK = False
            out_padded = build_call(False)(*args)
    else:
        out_padded = build_call(_SINGLE_BUFFER_OK)(*args)

    # Drop the lane padding of the 2-wide projection (ragged rows were already
    # masked by Pallas); return logits in the input dtype.
    return out_padded[:M, :2].astype(result_dtype)


def _init_params(key, hidden_size):
    """Deterministic init mimicking nn.Linear's uniform(-1/sqrt(fan_in), ...)."""
    k1, k2, k3, k4 = jax.random.split(key, 4)
    in1 = 2 * hidden_size
    bound1 = 1.0 / jnp.sqrt(in1)
    w1 = jax.random.uniform(k1, (in1, hidden_size), jnp.float32, -bound1, bound1)
    b1 = jax.random.uniform(k2, (hidden_size,), jnp.float32, -bound1, bound1)
    in2 = hidden_size
    bound2 = 1.0 / jnp.sqrt(in2)
    w2 = jax.random.uniform(k3, (in2, 2), jnp.float32, -bound2, bound2)
    b2 = jax.random.uniform(k4, (2,), jnp.float32, -bound2, bound2)
    return w1, b1, w2, b2


if __name__ == "__main__":
    B, S, H = 2, 8, 32  # batch, seq, hidden_size (small demo shapes)
    key = jax.random.PRNGKey(0)
    kx, kp = jax.random.split(key)
    x = jax.random.normal(kx, (B, S, H), jnp.float32)
    w1, b1, w2, b2 = _init_params(kp, H)

    # Reference in plain JAX (same math as the PyTorch forward).
    x2 = x.reshape(-1, 2 * H)
    ref = jnp.tanh(x2 @ w1 + b1) @ w2 + b2

    # f32 path (strict tolerance).
    out = roberta_classification_head(x, w1, b1, w2, b2)
    out = jax.block_until_ready(out)
    assert out.shape == (B * S // 2, 2)
    assert out.dtype == jnp.float32
    assert jnp.allclose(out, ref, atol=1e-5, rtol=1e-5)

    # bf16 compute path: both matmuls on the bf16 MXU, f32 accumulation,
    # bf16 padded writeback -> looser tolerance.
    out_bf16 = roberta_classification_head(
        x, w1, b1, w2, b2, compute_dtype=jnp.bfloat16)
    out_bf16 = jax.block_until_ready(out_bf16)
    assert out_bf16.shape == (B * S // 2, 2)
    assert out_bf16.dtype == jnp.float32
    assert jnp.allclose(out_bf16, ref, atol=5e-2, rtol=5e-2)

    print("KERNEL_OK")
</pallas_src>

<mosaic_0001>
module attributes {stable_mosaic.version = 11 : i64} {
  func.func @_head_kernel(%arg0: i32, %arg1: memref<8x64xf32, #tpu.memory_space<vmem>>, %arg2: memref<64x32xf32, #tpu.memory_space<vmem>>, %arg3: memref<1x32xf32, #tpu.memory_space<vmem>>, %arg4: memref<32x128xf32, #tpu.memory_space<vmem>>, %arg5: memref<1x128xf32, #tpu.memory_space<vmem>>, %arg6: memref<8x128xf32, #tpu.memory_space<vmem>>) attributes {dimension_semantics = [#tpu.dimension_semantics<parallel>], iteration_bounds = array<i64: 1>, scalar_prefetch = 0 : i64, scratch_operands = 0 : i64, tpu.core_type = #tpu.core_type<tc>, window_params = [{transform_indices = @transform_0, window_bounds = array<i64: 8, 64>}, {pipeline_mode = #tpu.pipeline_mode<synchronous>, transform_indices = @transform_1, window_bounds = array<i64: 64, 32>}, {pipeline_mode = #tpu.pipeline_mode<synchronous>, transform_indices = @transform_2, window_bounds = array<i64: 1, 32>}, {pipeline_mode = #tpu.pipeline_mode<synchronous>, transform_indices = @transform_3, window_bounds = array<i64: 32, 128>}, {pipeline_mode = #tpu.pipeline_mode<synchronous>, transform_indices = @transform_4, window_bounds = array<i64: 1, 128>}, {transform_indices = @transform_5, window_bounds = array<i64: 8, 128>}]} {
    %c0 = arith.constant 0 : index
    %c0_0 = arith.constant 0 : index
    %0 = vector.load %arg1[%c0, %c0_0] : memref<8x64xf32, #tpu.memory_space<vmem>>, vector<8x64xf32>
    %c0_1 = arith.constant 0 : index
    %c0_2 = arith.constant 0 : index
    %1 = vector.load %arg2[%c0_1, %c0_2] : memref<64x32xf32, #tpu.memory_space<vmem>>, vector<64x32xf32>
    %cst = arith.constant dense<0.000000e+00> : vector<8x32xf32>
    %2 = tpu.matmul %0, %1, %cst {dimension_numbers = #tpu.dot_dimension_numbers<[1], [0], [0], [1], [0, 0, 1, 1], [], []>} : vector<8x64xf32>, vector<64x32xf32>, vector<8x32xf32> -> vector<8x32xf32>
    %c0_3 = arith.constant 0 : index
    %c0_4 = arith.constant 0 : index
    %3 = vector.load %arg3[%c0_3, %c0_4] : memref<1x32xf32, #tpu.memory_space<vmem>>, vector<1x32xf32>
    %4 = vector.broadcast %3 : vector<1x32xf32> to vector<8x32xf32>
    %5 = arith.addf %2, %4 : vector<8x32xf32>
    %6 = math.tanh %5 : vector<8x32xf32>
    %c0_5 = arith.constant 0 : index
    %c0_6 = arith.constant 0 : index
    %7 = vector.load %arg4[%c0_5, %c0_6] : memref<32x128xf32, #tpu.memory_space<vmem>>, vector<32x128xf32>
    %cst_7 = arith.constant dense<0.000000e+00> : vector<8x128xf32>
    %8 = tpu.matmul %6, %7, %cst_7 {dimension_numbers = #tpu.dot_dimension_numbers<[1], [0], [0], [1], [0, 0, 1, 1], [], []>} : vector<8x32xf32>, vector<32x128xf32>, vector<8x128xf32> -> vector<8x128xf32>
    %c0_8 = arith.constant 0 : index
    %c0_9 = arith.constant 0 : index
    %9 = vector.load %arg5[%c0_8, %c0_9] : memref<1x128xf32, #tpu.memory_space<vmem>>, vector<1x128xf32>
    %10 = vector.broadcast %9 : vector<1x128xf32> to vector<8x128xf32>
    %11 = arith.addf %8, %10 : vector<8x128xf32>
    %c0_10 = arith.constant 0 : index
    %c0_11 = arith.constant 0 : index
    %12 = vector.load %arg6[%c0_10, %c0_11] : memref<8x128xf32, #tpu.memory_space<vmem>>, vector<8x128xf32>
    tpu.vector_store %arg6[%c0_10, %c0_11], %11 {strides = array<i32>} : memref<8x128xf32, #tpu.memory_space<vmem>>, vector<8x128xf32>,
    return
  }
  func.func @transform_0(%arg0: i32) -> (i32, i32) {
    %c0_i32 = arith.constant 0 : i32
    %c0_i32_0 = arith.constant 0 : i32
    return %arg0, %c0_i32 : i32, i32
  }
  func.func @transform_1(%arg0: i32) -> (i32, i32) {
    %c0_i32 = arith.constant 0 : i32
    %c0_i32_0 = arith.constant 0 : i32
    %c0_i32_1 = arith.constant 0 : i32
    return %c0_i32, %c0_i32_0 : i32, i32
  }
  func.func @transform_2(%arg0: i32) -> (i32, i32) {
    %c0_i32 = arith.constant 0 : i32
    %c0_i32_0 = arith.constant 0 : i32
    %c0_i32_1 = arith.constant 0 : i32
    return %c0_i32, %c0_i32_0 : i32, i32
  }
  func.func @transform_3(%arg0: i32) -> (i32, i32) {
    %c0_i32 = arith.constant 0 : i32
    %c0_i32_0 = arith.constant 0 : i32
    %c0_i32_1 = arith.constant 0 : i32
    return %c0_i32, %c0_i32_0 : i32, i32
  }
  func.func @transform_4(%arg0: i32) -> (i32, i32) {
    %c0_i32 = arith.constant 0 : i32
    %c0_i32_0 = arith.constant 0 : i32
    %c0_i32_1 = arith.constant 0 : i32
    return %c0_i32, %c0_i32_0 : i32, i32
  }
  func.func @transform_5(%arg0: i32) -> (i32, i32) {
    %c0_i32 = arith.constant 0 : i32
    %c0_i32_0 = arith.constant 0 : i32
    return %arg0, %c0_i32 : i32, i32
  }
}

module attributes {stable_mosaic.version = 11 : i64} {
  func.func @_head_kernel(%arg0: i32, %arg1: memref<8x64xf32, #tpu.memory_space<vmem>>, %arg2: memref<64x32xf32, #tpu.memory_space<vmem>>, %arg3: memref<1x32xf32, #tpu.memory_space<vmem>>, %arg4: memref<32x128xf32, #tpu.memory_space<vmem>>, %arg5: memref<1x128xf32, #tpu.memory_space<vmem>>, %arg6: memref<8x128xf32, #tpu.memory_space<vmem>>) attributes {dimension_semantics = [#tpu.dimension_semantics<parallel>], iteration_bounds = array<i64: 1>, scalar_prefetch = 0 : i64, scratch_operands = 0 : i64, tpu.core_type = #tpu.core_type<tc>, window_params = [{transform_indices = @transform_0, window_bounds = array<i64: 8, 64>}, {pipeline_mode = #tpu.pipeline_mode<synchronous>, transform_indices = @transform_1, window_bounds = array<i64: 64, 32>}, {pipeline_mode = #tpu.pipeline_mode<synchronous>, transform_indices = @transform_2, window_bounds = array<i64: 1, 32>}, {pipeline_mode = #tpu.pipeline_mode<synchronous>, transform_indices = @transform_3, window_bounds = array<i64: 32, 128>}, {pipeline_mode = #tpu.pipeline_mode<synchronous>, transform_indices = @transform_4, window_bounds = array<i64: 1, 128>}, {transform_indices = @transform_5, window_bounds = array<i64: 8, 128>}]} {
    %c0 = arith.constant 0 : index
    %c0_0 = arith.constant 0 : index
    %0 = vector.load %arg1[%c0, %c0_0] : memref<8x64xf32, #tpu.memory_space<vmem>>, vector<8x64xf32>
    %c0_1 = arith.constant 0 : index
    %c0_2 = arith.constant 0 : index
    %1 = vector.load %arg2[%c0_1, %c0_2] : memref<64x32xf32, #tpu.memory_space<vmem>>, vector<64x32xf32>
    %cst = arith.constant dense<0.000000e+00> : vector<8x32xf32>
    %2 = tpu.matmul %0, %1, %cst {dimension_numbers = #tpu.dot_dimension_numbers<[1], [0], [0], [1], [0, 0, 1, 1], [], []>} : vector<8x64xf32>, vector<64x32xf32>, vector<8x32xf32> -> vector<8x32xf32>
    %c0_3 = arith.constant 0 : index
    %c0_4 = arith.constant 0 : index
    %3 = vector.load %arg3[%c0_3, %c0_4] : memref<1x32xf32, #tpu.memory_space<vmem>>, vector<1x32xf32>
    %4 = vector.broadcast %3 : vector<1x32xf32> to vector<8x32xf32>
    %5 = arith.addf %2, %4 : vector<8x32xf32>
    %6 = math.tanh %5 : vector<8x32xf32>
    %c0_5 = arith.constant 0 : index
    %c0_6 = arith.constant 0 : index
    %7 = vector.load %arg4[%c0_5, %c0_6] : memref<32x128xf32, #tpu.memory_space<vmem>>, vector<32x128xf32>
    %cst_7 = arith.constant dense<0.000000e+00> : vector<8x128xf32>
    %8 = tpu.matmul %6, %7, %cst_7 {dimension_numbers = #tpu.dot_dimension_numbers<[1], [0], [0], [1], [0, 0, 1, 1], [], []>} : vector<8x32xf32>, vector<32x128xf32>, vector<8x128xf32> -> vector<8x128xf32>
    %c0_8 = arith.constant 0 : index
    %c0_9 = arith.constant 0 : index
    %9 = vector.load %arg5[%c0_8, %c0_9] : memref<1x128xf32, #tpu.memory_space<vmem>>, vector<1x128xf32>
    %10 = vector.broadcast %9 : vector<1x128xf32> to vector<8x128xf32>
    %11 = arith.addf %8, %10 : vector<8x128xf32>
    %c0_10 = arith.constant 0 : index
    %c0_11 = arith.constant 0 : index
    %12 = vector.load %arg6[%c0_10, %c0_11] : memref<8x128xf32, #tpu.memory_space<vmem>>, vector<8x128xf32>
    tpu.vector_store %arg6[%c0_10, %c0_11], %11 {strides = array<i32>} : memref<8x128xf32, #tpu.memory_space<vmem>>, vector<8x128xf32>,
    return
  }
  func.func @transform_0(%arg0: i32) -> (i32, i32) {
    %c0_i32 = arith.constant 0 : i32
    %c0_i32_0 = arith.constant 0 : i32
    return %arg0, %c0_i32 : i32, i32
  }
  func.func @transform_1(%arg0: i32) -> (i32, i32) {
    %c0_i32 = arith.constant 0 : i32
    %c0_i32_0 = arith.constant 0 : i32
    %c0_i32_1 = arith.constant 0 : i32
    return %c0_i32, %c0_i32_0 : i32, i32
  }
  func.func @transform_2(%arg0: i32) -> (i32, i32) {
    %c0_i32 = arith.constant 0 : i32
    %c0_i32_0 = arith.constant 0 : i32
    %c0_i32_1 = arith.constant 0 : i32
    return %c0_i32, %c0_i32_0 : i32, i32
  }
  func.func @transform_3(%arg0: i32) -> (i32, i32) {
    %c0_i32 = arith.constant 0 : i32
    %c0_i32_0 = arith.constant 0 : i32
    %c0_i32_1 = arith.constant 0 : i32
    return %c0_i32, %c0_i32_0 : i32, i32
  }
  func.func @transform_4(%arg0: i32) -> (i32, i32) {
    %c0_i32 = arith.constant 0 : i32
    %c0_i32_0 = arith.constant 0 : i32
    %c0_i32_1 = arith.constant 0 : i32
    return %c0_i32, %c0_i32_0 : i32, i32
  }
  func.func @transform_5(%arg0: i32) -> (i32, i32) {
    %c0_i32 = arith.constant 0 : i32
    %c0_i32_0 = arith.constant 0 : i32
    return %arg0, %c0_i32 : i32, i32
  }
}

</mosaic_0001>

<llo_original>
// kernel: tpu_custom_call.1
$region0: #{tpu_custom_call.1}
  #allocation0 [shape = 'u32[]', space=smem, size = 0x4, offset = 0x4, fixed_abs, tag = 'smem constant byte address 0x4 - core index']
  #allocation1 [shape = 'u32[144,128]{1,0:T(1,128)}', space=vmem, size = 0x12000, scoped, tag = 'internal scratch']
  %s0 = inlined_call_operand.vmem [shape: f32[8,64], index: 0, kind: input, shape index: {}]
  %s1 = inlined_call_operand.vmem [shape: f32[64,32], index: 1, kind: input, shape index: {}]
  %s2 = inlined_call_operand.vmem [shape: f32[1,32], index: 2, kind: input, shape index: {}]
  %s3 = inlined_call_operand.vmem [shape: f32[32,128], index: 3, kind: input, shape index: {}]
  %s4 = inlined_call_operand.vmem [shape: f32[1,128], index: 4, kind: input, shape index: {}]
  %s5 = inlined_call_operand.hbm [shape: f32[8,128], index: 5, kind: output, shape index: {}]
  %s6 = sld [smem:[#allocation0]]
  $region30: #{tpu_custom_call.1} parent=0
    _
  %s8 = ssub.s32 1, %s6
  %s9 = scalar_select 0, %s8, %s6
  $region1: #{tpu_custom_call.1} parent=0
    #allocation2 [shape = 'u8[4096]{0}', space=vmem, size = 0x1000, scoped, tag = 'output window, operand 0, single buffered']
    #allocation3 [shape = 's32[1]{0}', space=sflag, size = 0x4, scoped, tag = 'scoped memory for tpu_custom_call.1']
    %10 = vsyncpa [#allocation3], 0
    // Predicated region
    $region2: #{tpu_custom_call.1} parent=1 // pred_check
      _
    $region3: #{tpu_custom_call.1} parent=1 // pred_check_branch
      %12 = sbr.rel (0) target = $region5
    $region4: #{tpu_custom_call.1} parent=1 // pred_region
      _
    $region5: #{tpu_custom_call.1} parent=1 // pred_fallthru
      _
    // Predicated region
    $region6: #{tpu_custom_call.1} parent=1 // pred_check
      _
    $region7: #{tpu_custom_call.1} parent=1 // pred_check_branch
      %14 = sbr.rel (0) target = $region9
    $region8: #{tpu_custom_call.1} parent=1 // pred_region
      _
    $region9: #{tpu_custom_call.1} parent=1 // pred_fallthru
      _
    // Predicated region
    $region10: #{tpu_custom_call.1} parent=1 // pred_check
      _
    $region11: #{tpu_custom_call.1} parent=1 // pred_check_branch
      %16 = sbr.rel (0) target = $region13
    $region12: #{tpu_custom_call.1} parent=1 // pred_region
      _
    $region13: #{tpu_custom_call.1} parent=1 // pred_fallthru
      _
    // Predicated region
    $region14: #{tpu_custom_call.1} parent=1 // pred_check
      _
    $region15: #{tpu_custom_call.1} parent=1 // pred_check_branch
      %18 = sbr.rel (0) target = $region17
    $region16: #{tpu_custom_call.1} parent=1 // pred_region
      _
    $region17: #{tpu_custom_call.1} parent=1 // pred_fallthru
      _
    // Predicated region
    $region18: #{tpu_custom_call.1} parent=1 // pred_check
      _
    $region19: #{tpu_custom_call.1} parent=1 // pred_check_branch
      %20 = sbr.rel (0) target = $region21
    $region20: #{tpu_custom_call.1} parent=1 // pred_region
      _
    $region21: #{tpu_custom_call.1} parent=1 // pred_fallthru
      _
    %v21 = vld [vmem:[%s0] sm:$0xff]
    %v22 = vld [vmem:[%s1] sm:$0xff]
    %v23 = vld [vmem:[%s1 + $0x8] sm:$0xff]
    %v24 = vld [vmem:[%s1 + $0x10] sm:$0xff]
    %v25 = vld [vmem:[%s1 + $0x18] sm:$0xff]
    %v26 = vld [vmem:[%s1 + $0x20] sm:$0xff]
    %v27 = vld [vmem:[%s1 + $0x28] sm:$0xff]
    %v28 = vld [vmem:[%s1 + $0x30] sm:$0xff]
    %v29 = vld [vmem:[%s1 + $0x38] sm:$0xff]
    %v30 = vld [vmem:[%s2] sm:$0x1]
    %v32 = vlaneseq
    %v33 = vshrl.u32 %v32, 7
    %v34 = vsub.s32 0, %v33
    %v35 = vrot.slane %v30, %v34
    %vm37 = vcmask 523264
    %v39 = vsel %vm37, %v21, 0
    %41 = vmatprep.subr.mxu0 0.0
    %42 = vmatpush1.msra.mxu0 0.0
    %43 = vmatprep.subr.mxu0 0.0
    %44 = vmatpush1.msra.mxu0 0.0
    %45 = vmatprep.subr.mxu0 0.0
    %46 = vmatpush1.msra.mxu0 0.0
    %47 = vmatprep.subr.mxu0 0.0
    %48 = vmatpush1.msra.mxu0 0.0
    %49 = vmatprep.subr.mxu0 0.0
    %50 = vmatpush1.msra.mxu0 0.0
    %51 = vmatprep.subr.mxu0 0.0
    %52 = vmatpush1.msra.mxu0 0.0
    %53 = vmatprep.subr.mxu0 0.0
    %54 = vmatpush1.msra.mxu0 0.0
    %55 = vmatprep.subr.mxu0 0.0
    %56 = vmatpush1.msra.mxu0 0.0
    %57 = vmatprep.subr.mxu0 0.0
    %58 = vmatpush1.msra.mxu0 %v29
    %59 = vmatprep.subr.mxu0 0.0
    %60 = vmatpush1.msra.mxu0 %v28
    %61 = vmatprep.subr.mxu0 0.0
    %62 = vmatpush1.msra.mxu0 %v27
    %63 = vmatprep.subr.mxu0 0.0
    %64 = vmatpush1.msra.mxu0 %v26
    %65 = vmatprep.subr.mxu0 0.0
    %66 = vmatpush1.msra.mxu0 %v25
    %67 = vmatprep.subr.mxu0 0.0
    %68 = vmatpush1.msra.mxu0 %v24
    %69 = vmatprep.subr.mxu0 0.0
    %70 = vmatpush1.msra.mxu0 %v23
    %71 = vmatprep.subr.mxu0 0.0
    %72 = vmatpush1.msra.mxu0 %v22
    %73 = vmatprep.subr.mxu0 0.0
    %74 = vmatpush2.msra.mxu0 0.0
    %75 = vmatprep.subr.mxu0 0.0
    %76 = vmatpush2.msra.mxu0 0.0
    %77 = vmatprep.subr.mxu0 0.0
    %78 = vmatpush2.msra.mxu0 0.0
    %79 = vmatprep.subr.mxu0 0.0
    %80 = vmatpush2.msra.mxu0 0.0
    %81 = vmatprep.subr.mxu0 0.0
    %82 = vmatpush2.msra.mxu0 0.0
    %83 = vmatprep.subr.mxu0 0.0
    %84 = vmatpush2.msra.mxu0 0.0
    %85 = vmatprep.subr.mxu0 0.0
    %86 = vmatpush2.msra.mxu0 0.0
    %87 = vmatprep.subr.mxu0 0.0
    %88 = vmatpush2.msra.mxu0 0.0
    %89 = vmatprep.subr.mxu0 0.0
    %90 = vmatpush2.msra.mxu0 0.0
    %91 = vmatprep.subr.mxu0 0.0
    %92 = vmatpush2.msra.mxu0 0.0
    %93 = vmatprep.subr.mxu0 0.0
    %94 = vmatpush2.msra.mxu0 0.0
    %95 = vmatprep.subr.mxu0 0.0
    %96 = vmatpush2.msra.mxu0 0.0
    %97 = vmatprep.subr.mxu0 0.0
    %98 = vmatpush2.msra.mxu0 0.0
    %99 = vmatprep.subr.mxu0 0.0
    %100 = vmatpush2.msra.mxu0 0.0
    %101 = vmatprep.subr.mxu0 0.0
    %102 = vmatpush2.msra.mxu0 0.0
    %103 = vmatprep.subr.mxu0 0.0
    %104 = vmatpush2.msra.mxu0 0.0
    %105 = vmatprep.mubr.f32.mxu0 0.0
    %106 = vmatmul.mubr.f32.gmra.mxu0 %v39
    %v107 = vpop.f32.mrf.mxu0
    %v108 = vadd.f32 %v35, %v107
    %v109 = vpop.f32.mrf.mxu0
    %110 = vdwg.mxu0
    %v111 = vtanh.pop %v108
    %v112 = vld [vmem:[%s3] sm:$0xff]
    %v113 = vld [vmem:[%s3 + $0x8] sm:$0xff]
    %v114 = vld [vmem:[%s3 + $0x10] sm:$0xff]
    %v115 = vld [vmem:[%s3 + $0x18] sm:$0xff]
    %v116 = vld [vmem:[%s4] sm:$0x1]
    %v118 = vlaneseq
    %v119 = vshrl.u32 %v118, 7
    %v120 = vsub.s32 0, %v119
    %v121 = vrot.slane %v116, %v120
    %vm123 = vcmask 261120
    %v125 = vsel %vm123, %v111, 0
    %127 = vmatprep.subr.mxu0 0.0
    %128 = vmatpush1.msra.mxu0 0.0
    %129 = vmatprep.subr.mxu0 0.0
    %130 = vmatpush1.msra.mxu0 0.0
    %131 = vmatprep.subr.mxu0 0.0
    %132 = vmatpush1.msra.mxu0 0.0
    %133 = vmatprep.subr.mxu0 0.0
    %134 = vmatpush1.msra.mxu0 0.0
    %135 = vmatprep.subr.mxu0 0.0
    %136 = vmatpush1.msra.mxu0 0.0
    %137 = vmatprep.subr.mxu0 0.0
    %138 = vmatpush1.msra.mxu0 0.0
    %139 = vmatprep.subr.mxu0 0.0
    %140 = vmatpush1.msra.mxu0 0.0
    %141 = vmatprep.subr.mxu0 0.0
    %142 = vmatpush1.msra.mxu0 0.0
    %143 = vmatprep.subr.mxu0 0.0
    %144 = vmatpush1.msra.mxu0 0.0
    %145 = vmatprep.subr.mxu0 0.0
    %146 = vmatpush1.msra.mxu0 0.0
    %147 = vmatprep.subr.mxu0 0.0
    %148 = vmatpush1.msra.mxu0 0.0
    %149 = vmatprep.subr.mxu0 0.0
    %150 = vmatpush1.msra.mxu0 0.0
    %151 = vmatprep.subr.mxu0 0.0
    %152 = vmatpush1.msra.mxu0 %v115
    %153 = vmatprep.subr.mxu0 0.0
    %154 = vmatpush1.msra.mxu0 %v114
    %155 = vmatprep.subr.mxu0 0.0
    %156 = vmatpush1.msra.mxu0 %v113
    %157 = vmatprep.subr.mxu0 0.0
    %158 = vmatpush1.msra.mxu0 %v112
    %159 = vmatprep.subr.mxu0 0.0
    %160 = vmatpush2.msra.mxu0 0.0
    %161 = vmatprep.subr.mxu0 0.0
    %162 = vmatpush2.msra.mxu0 0.0
    %163 = vmatprep.subr.mxu0 0.0
    %164 = vmatpush2.msra.mxu0 0.0
    %165 = vmatprep.subr.mxu0 0.0
    %166 = vmatpush2.msra.mxu0 0.0
    %167 = vmatprep.subr.mxu0 0.0
    %168 = vmatpush2.msra.mxu0 0.0
    %169 = vmatprep.subr.mxu0 0.0
    %170 = vmatpush2.msra.mxu0 0.0
    %171 = vmatprep.subr.mxu0 0.0
    %172 = vmatpush2.msra.mxu0 0.0
    %173 = vmatprep.subr.mxu0 0.0
    %174 = vmatpush2.msra.mxu0 0.0
    %175 = vmatprep.subr.mxu0 0.0
    %176 = vmatpush2.msra.mxu0 0.0
    %177 = vmatprep.subr.mxu0 0.0
    %178 = vmatpush2.msra.mxu0 0.0
    %179 = vmatprep.subr.mxu0 0.0
    %180 = vmatpush2.msra.mxu0 0.0
    %181 = vmatprep.subr.mxu0 0.0
    %182 = vmatpush2.msra.mxu0 0.0
    %183 = vmatprep.subr.mxu0 0.0
    %184 = vmatpush2.msra.mxu0 0.0
    %185 = vmatprep.subr.mxu0 0.0
    %186 = vmatpush2.msra.mxu0 0.0
    %187 = vmatprep.subr.mxu0 0.0
    %188 = vmatpush2.msra.mxu0 0.0
    %189 = vmatprep.subr.mxu0 0.0
    %190 = vmatpush2.msra.mxu0 0.0
    %191 = vmatprep.mubr.f32.mxu0 0.0
    %192 = vmatmul.mubr.f32.gmra.mxu0 %v125
    %v193 = vpop.f32.mrf.mxu0
    %v194 = vadd.f32 %v121, %v193
    %v195 = vpop.f32.mrf.mxu0
    %196 = vdwg.mxu0
    %197 = vst [vmem:[#allocation2] sm:$0xff] %v194
    // Predicated region
    $region22: #{tpu_custom_call.1} parent=1 // pred_check
      _
    $region23: #{tpu_custom_call.1} parent=1 // pred_check_branch
      %199 = sbr.rel (0) target = $region25
    $region24: #{tpu_custom_call.1} parent=1 // pred_region
      %s201 = ssub.s32 128, 128
      %202 = vsyncadd [#allocation3], %s201
      %s204 = sshll.u32 [#allocation2], 4
      %s205 = int_to_ptr.vmem [resolvable:$true] %s204
      %207 = dma.vmem_to_hbm [thread:$0]  %s205, 128, %s5, [#allocation3]
    $region25: #{tpu_custom_call.1} parent=1 // pred_fallthru
      _
    // Predicated region
    $region26: #{tpu_custom_call.1} parent=1 // pred_check
      _
    $region27: #{tpu_custom_call.1} parent=1 // pred_check_branch
      %209 = sbr.rel (0) target = $region29
    $region28: #{tpu_custom_call.1} parent=1 // pred_region
      %210 = dma.done [#allocation3], 128
    $region29: #{tpu_custom_call.1} parent=1 // pred_fallthru
      _
    %211 = vsyncpa [#allocation3], 1

// kernel: tpu_custom_call.1
$region0: #{tpu_custom_call.1}
  #allocation0 [shape = 'u32[]', space=smem, size = 0x4, offset = 0x4, fixed_abs, tag = 'smem constant byte address 0x4 - core index']
  #allocation1 [shape = 'u32[144,128]{1,0:T(1,128)}', space=vmem, size = 0x12000, scoped, tag = 'internal scratch']
  %s0 = inlined_call_operand.vmem [shape: f32[8,64], index: 0, kind: input, shape index: {}]
  %s1 = inlined_call_operand.vmem [shape: f32[64,32], index: 1, kind: input, shape index: {}]
  %s2 = inlined_call_operand.vmem [shape: f32[1,32], index: 2, kind: input, shape index: {}]
  %s3 = inlined_call_operand.vmem [shape: f32[32,128], index: 3, kind: input, shape index: {}]
  %s4 = inlined_call_operand.vmem [shape: f32[1,128], index: 4, kind: input, shape index: {}]
  %s5 = inlined_call_operand.hbm [shape: f32[8,128], index: 5, kind: output, shape index: {}]
  %s6 = sld [smem:[#allocation0]]
  $region30: #{tpu_custom_call.1} parent=0
    _
  %s8 = ssub.s32 1, %s6
  %s9 = scalar_select 0, %s8, %s6
  $region1: #{tpu_custom_call.1} parent=0
    #allocation2 [shape = 'u8[4096]{0}', space=vmem, size = 0x1000, scoped, tag = 'output window, operand 0, single buffered']
    #allocation3 [shape = 's32[1]{0}', space=sflag, size = 0x4, scoped, tag = 'scoped memory for tpu_custom_call.1']
    %10 = vsyncpa [#allocation3], 0
    // Predicated region
    $region2: #{tpu_custom_call.1} parent=1 // pred_check
      _
    $region3: #{tpu_custom_call.1} parent=1 // pred_check_branch
      %12 = sbr.rel (0) target = $region5
    $region4: #{tpu_custom_call.1} parent=1 // pred_region
      _
    $region5: #{tpu_custom_call.1} parent=1 // pred_fallthru
      _
    // Predicated region
    $region6: #{tpu_custom_call.1} parent=1 // pred_check
      _
    $region7: #{tpu_custom_call.1} parent=1 // pred_check_branch
      %14 = sbr.rel (0) target = $region9
    $region8: #{tpu_custom_call.1} parent=1 // pred_region
      _
    $region9: #{tpu_custom_call.1} parent=1 // pred_fallthru
      _
    // Predicated region
    $region10: #{tpu_custom_call.1} parent=1 // pred_check
      _
    $region11: #{tpu_custom_call.1} parent=1 // pred_check_branch
      %16 = sbr.rel (0) target = $region13
    $region12: #{tpu_custom_call.1} parent=1 // pred_region
      _
    $region13: #{tpu_custom_call.1} parent=1 // pred_fallthru
      _
    // Predicated region
    $region14: #{tpu_custom_call.1} parent=1 // pred_check
      _
    $region15: #{tpu_custom_call.1} parent=1 // pred_check_branch
      %18 = sbr.rel (0) target = $region17
    $region16: #{tpu_custom_call.1} parent=1 // pred_region
      _
    $region17: #{tpu_custom_call.1} parent=1 // pred_fallthru
      _
    // Predicated region
    $region18: #{tpu_custom_call.1} parent=1 // pred_check
      _
    $region19: #{tpu_custom_call.1} parent=1 // pred_check_branch
      %20 = sbr.rel (0) target = $region21
    $region20: #{tpu_custom_call.1} parent=1 // pred_region
      _
    $region21: #{tpu_custom_call.1} parent=1 // pred_fallthru
      _
    %v21 = vld [vmem:[%s0] sm:$0xff]
    %v22 = vld [vmem:[%s1] sm:$0xff]
    %v23 = vld [vmem:[%s1 + $0x8] sm:$0xff]
    %v24 = vld [vmem:[%s1 + $0x10] sm:$0xff]
    %v25 = vld [vmem:[%s1 + $0x18] sm:$0xff]
    %v26 = vld [vmem:[%s1 + $0x20] sm:$0xff]
    %v27 = vld [vmem:[%s1 + $0x28] sm:$0xff]
    %v28 = vld [vmem:[%s1 + $0x30] sm:$0xff]
    %v29 = vld [vmem:[%s1 + $0x38] sm:$0xff]
    %v30 = vld [vmem:[%s2] sm:$0x1]
    %v32 = vlaneseq
    %v33 = vshrl.u32 %v32, 7
    %v34 = vsub.s32 0, %v33
    %v35 = vrot.slane %v30, %v34
    %vm37 = vcmask 523264
    %v39 = vsel %vm37, %v21, 0
    %41 = vmatprep.subr.mxu0 0.0
    %42 = vmatpush1.msra.mxu0 0.0
    %43 = vmatprep.subr.mxu0 0.0
    %44 = vmatpush1.msra.mxu0 0.0
    %45 = vmatprep.subr.mxu0 0.0
    %46 = vmatpush1.msra.mxu0 0.0
    %47 = vmatprep.subr.mxu0 0.0
    %48 = vmatpush1.msra.mxu0 0.0
    %49 = vmatprep.subr.mxu0 0.0
    %50 = vmatpush1.msra.mxu0 0.0
    %51 = vmatprep.subr.mxu0 0.0
    %52 = vmatpush1.msra.mxu0 0.0
    %53 = vmatprep.subr.mxu0 0.0
    %54 = vmatpush1.msra.mxu0 0.0
    %55 = vmatprep.subr.mxu0 0.0
    %56 = vmatpush1.msra.mxu0 0.0
    %57 = vmatprep.subr.mxu0 0.0
    %58 = vmatpush1.msra.mxu0 %v29
    %59 = vmatprep.subr.mxu0 0.0
    %60 = vmatpush1.msra.mxu0 %v28
    %61 = vmatprep.subr.mxu0 0.0
    %62 = vmatpush1.msra.mxu0 %v27
    %63 = vmatprep.subr.mxu0 0.0
    %64 = vmatpush1.msra.mxu0 %v26
    %65 = vmatprep.subr.mxu0 0.0
    %66 = vmatpush1.msra.mxu0 %v25
    %67 = vmatprep.subr.mxu0 0.0
    %68 = vmatpush1.msra.mxu0 %v24
    %69 = vmatprep.subr.mxu0 0.0
    %70 = vmatpush1.msra.mxu0 %v23
    %71 = vmatprep.subr.mxu0 0.0
    %72 = vmatpush1.msra.mxu0 %v22
    %73 = vmatprep.subr.mxu0 0.0
    %74 = vmatpush2.msra.mxu0 0.0
    %75 = vmatprep.subr.mxu0 0.0
    %76 = vmatpush2.msra.mxu0 0.0
    %77 = vmatprep.subr.mxu0 0.0
    %78 = vmatpush2.msra.mxu0 0.0
    %79 = vmatprep.subr.mxu0 0.0
    %80 = vmatpush2.msra.mxu0 0.0
    %81 = vmatprep.subr.mxu0 0.0
    %82 = vmatpush2.msra.mxu0 0.0
    %83 = vmatprep.subr.mxu0 0.0
    %84 = vmatpush2.msra.mxu0 0.0
    %85 = vmatprep.subr.mxu0 0.0
    %86 = vmatpush2.msra.mxu0 0.0
    %87 = vmatprep.subr.mxu0 0.0
    %88 = vmatpush2.msra.mxu0 0.0
    %89 = vmatprep.subr.mxu0 0.0
    %90 = vmatpush2.msra.mxu0 0.0
    %91 = vmatprep.subr.mxu0 0.0
    %92 = vmatpush2.msra.mxu0 0.0
    %93 = vmatprep.subr.mxu0 0.0
    %94 = vmatpush2.msra.mxu0 0.0
    %95 = vmatprep.subr.mxu0 0.0
    %96 = vmatpush2.msra.mxu0 0.0
    %97 = vmatprep.subr.mxu0 0.0
    %98 = vmatpush2.msra.mxu0 0.0
    %99 = vmatprep.subr.mxu0 0.0
    %100 = vmatpush2.msra.mxu0 0.0
    %101 = vmatprep.subr.mxu0 0.0
    %102 = vmatpush2.msra.mxu0 0.0
    %103 = vmatprep.subr.mxu0 0.0
    %104 = vmatpush2.msra.mxu0 0.0
    %105 = vmatprep.mubr.f32.mxu0 0.0
    %106 = vmatmul.mubr.f32.gmra.mxu0 %v39
    %v107 = vpop.f32.mrf.mxu0
    %v108 = vadd.f32 %v35, %v107
    %v109 = vpop.f32.mrf.mxu0
    %110 = vdwg.mxu0
    %v111 = vtanh.pop %v108
    %v112 = vld [vmem:[%s3] sm:$0xff]
    %v113 = vld [vmem:[%s3 + $0x8] sm:$0xff]
    %v114 = vld [vmem:[%s3 + $0x10] sm:$0xff]
    %v115 = vld [vmem:[%s3 + $0x18] sm:$0xff]
    %v116 = vld [vmem:[%s4] sm:$0x1]
    %v118 = vlaneseq
    %v119 = vshrl.u32 %v118, 7
    %v120 = vsub.s32 0, %v119
    %v121 = vrot.slane %v116, %v120
    %vm123 = vcmask 261120
    %v125 = vsel %vm123, %v111, 0
    %127 = vmatprep.subr.mxu0 0.0
    %128 = vmatpush1.msra.mxu0 0.0
    %129 = vmatprep.subr.mxu0 0.0
    %130 = vmatpush1.msra.mxu0 0.0
    %131 = vmatprep.subr.mxu0 0.0
    %132 = vmatpush1.msra.mxu0 0.0
    %133 = vmatprep.subr.mxu0 0.0
    %134 = vmatpush1.msra.mxu0 0.0
    %135 = vmatprep.subr.mxu0 0.0
    %136 = vmatpush1.msra.mxu0 0.0
    %137 = vmatprep.subr.mxu0 0.0
    %138 = vmatpush1.msra.mxu0 0.0
    %139 = vmatprep.subr.mxu0 0.0
    %140 = vmatpush1.msra.mxu0 0.0
    %141 = vmatprep.subr.mxu0 0.0
    %142 = vmatpush1.msra.mxu0 0.0
    %143 = vmatprep.subr.mxu0 0.0
    %144 = vmatpush1.msra.mxu0 0.0
    %145 = vmatprep.subr.mxu0 0.0
    %146 = vmatpush1.msra.mxu0 0.0
    %147 = vmatprep.subr.mxu0 0.0
    %148 = vmatpush1.msra.mxu0 0.0
    %149 = vmatprep.subr.mxu0 0.0
    %150 = vmatpush1.msra.mxu0 0.0
    %151 = vmatprep.subr.mxu0 0.0
    %152 = vmatpush1.msra.mxu0 %v115
    %153 = vmatprep.subr.mxu0 0.0
    %154 = vmatpush1.msra.mxu0 %v114
    %155 = vmatprep.subr.mxu0 0.0
    %156 = vmatpush1.msra.mxu0 %v113
    %157 = vmatprep.subr.mxu0 0.0
    %158 = vmatpush1.msra.mxu0 %v112
    %159 = vmatprep.subr.mxu0 0.0
    %160 = vmatpush2.msra.mxu0 0.0
    %161 = vmatprep.subr.mxu0 0.0
    %162 = vmatpush2.msra.mxu0 0.0
    %163 = vmatprep.subr.mxu0 0.0
    %164 = vmatpush2.msra.mxu0 0.0
    %165 = vmatprep.subr.mxu0 0.0
    %166 = vmatpush2.msra.mxu0 0.0
    %167 = vmatprep.subr.mxu0 0.0
    %168 = vmatpush2.msra.mxu0 0.0
    %169 = vmatprep.subr.mxu0 0.0
    %170 = vmatpush2.msra.mxu0 0.0
    %171 = vmatprep.subr.mxu0 0.0
    %172 = vmatpush2.msra.mxu0 0.0
    %173 = vmatprep.subr.mxu0 0.0
    %174 = vmatpush2.msra.mxu0 0.0
    %175 = vmatprep.subr.mxu0 0.0
    %176 = vmatpush2.msra.mxu0 0.0
    %177 = vmatprep.subr.mxu0 0.0
    %178 = vmatpush2.msra.mxu0 0.0
    %179 = vmatprep.subr.mxu0 0.0
    %180 = vmatpush2.msra.mxu0 0.0
    %181 = vmatprep.subr.mxu0 0.0
    %182 = vmatpush2.msra.mxu0 0.0
    %183 = vmatprep.subr.mxu0 0.0
    %184 = vmatpush2.msra.mxu0 0.0
    %185 = vmatprep.subr.mxu0 0.0
    %186 = vmatpush2.msra.mxu0 0.0
    %187 = vmatprep.subr.mxu0 0.0
    %188 = vmatpush2.msra.mxu0 0.0
    %189 = vmatprep.subr.mxu0 0.0
    %190 = vmatpush2.msra.mxu0 0.0
    %191 = vmatprep.mubr.f32.mxu0 0.0
    %192 = vmatmul.mubr.f32.gmra.mxu0 %v125
    %v193 = vpop.f32.mrf.mxu0
    %v194 = vadd.f32 %v121, %v193
    %v195 = vpop.f32.mrf.mxu0
    %196 = vdwg.mxu0
    %197 = vst [vmem:[#allocation2] sm:$0xff] %v194
    // Predicated region
    $region22: #{tpu_custom_call.1} parent=1 // pred_check
      _
    $region23: #{tpu_custom_call.1} parent=1 // pred_check_branch
      %199 = sbr.rel (0) target = $region25
    $region24: #{tpu_custom_call.1} parent=1 // pred_region
      %s201 = ssub.s32 128, 128
      %202 = vsyncadd [#allocation3], %s201
      %s204 = sshll.u32 [#allocation2], 4
      %s205 = int_to_ptr.vmem [resolvable:$true] %s204
      %207 = dma.vmem_to_hbm [thread:$0]  %s205, 128, %s5, [#allocation3]
    $region25: #{tpu_custom_call.1} parent=1 // pred_fallthru
      _
    // Predicated region
    $region26: #{tpu_custom_call.1} parent=1 // pred_check
      _
    $region27: #{tpu_custom_call.1} parent=1 // pred_check_branch
      %209 = sbr.rel (0) target = $region29
    $region28: #{tpu_custom_call.1} parent=1 // pred_region
      %210 = dma.done [#allocation3], 128
    $region29: #{tpu_custom_call.1} parent=1 // pred_fallthru
      _
    %211 = vsyncpa [#allocation3], 1

</llo_original>
